<compile_context>
chip_gen: v7x
topology: tpu7x:2x2x1
jax: 0.10.0
libtpu: 0.0.40
codegen_flags: <defaults>
</compile_context>

<pallas_src>
import functools
import math

import jax
import jax.numpy as jnp
from jax.experimental import pallas as pl
from jax.experimental.pallas import tpu as pltpu


# ----------------------------------------------------------------- helpers --

def _round_up(x, m):
    return ((x + m - 1) // m) * m


def _pad2(a, rows, cols):
    return jnp.pad(a, ((0, rows - a.shape[0]), (0, cols - a.shape[1])))


def _elu(h):
    # ELU(alpha=1) in f32.  exp is taken on min(h, 0) so the positive branch
    # never overflows.
    return jnp.where(h > 0.0, h, jnp.exp(jnp.minimum(h, 0.0)) - 1.0)


def _sigmoid(x):
    # Exact logistic shared by the kernel and the references (the approximate
    # EUP reciprocal introduced up to ~1e-3..4e-3 error and broke parity).
    return 1.0 / (1.0 + jnp.exp(-x))


def _choose_tiles(n, tile_n=None, tile_k=None):
    """Pick (n_pad, tile_n, tile_k); tile_k tiles the node-contraction axis."""
    if tile_n is not None and tile_k is not None:
        return _round_up(n, math.lcm(tile_n, tile_k)), tile_n, tile_k
    n_pad = _round_up(max(n, 16), 16)
    if n_pad <= 512:
        # Small graph: whole contraction in one K block; split the row axis in
        # two so the parallel grid axis can feed both v7x TensorCores.
        return n_pad, n_pad // 2, n_pad
    # Large graph: stream the adjacency in (tile_n, tile_k) bf16 blocks.
    # v5e/v6e can raise tile_n to 512; v7x (64 MiB VMEM) keep 128-256.
    return _round_up(n, 512), 256, 512


def _compiler_params(dim_sems, need_bytes):
    # Explicit VMEM budget derived from the actual block sizes (+ headroom),
    # kept under v7x's 64 MiB physical VMEM.
    limit = int(min(max(4 * need_bytes, 32 << 20), 56 << 20))
    limit = max(limit, int(need_bytes) + (4 << 20))
    return pltpu.CompilerParams(dimension_semantics=dim_sems,
                                vmem_limit_bytes=limit)


# ----------------------------------------------------------------- kernels --

def _proj_kernel(x_ref, w_ref, xw_ref):
    # xw = X @ W_base        (bf16 in, f32 MXU accumulation, bf16 out)
    xw_ref[...] = jnp.dot(
        x_ref[...], w_ref[...], preferred_element_type=jnp.float32
    ).astype(xw_ref.dtype)


def _base_gcn_kernel(adj_ref, xw_ref, wcat_ref, hw_ref, acc_ref):
    # K-tiled: acc += adj_blk @ xw_blk ; on last K: hw = ELU(acc) @ [Wm | Ws]
    k = pl.program_id(1)

    @pl.when(k == 0)
    def _():
        acc_ref[...] = jnp.zeros_like(acc_ref)

    acc_ref[...] += jnp.dot(
        adj_ref[...], xw_ref[...], preferred_element_type=jnp.float32)

    @pl.when(k == pl.num_programs(1) - 1)
    def _():
        h = _elu(acc_ref[...]).astype(jnp.bfloat16)
        hw_ref[...] = jnp.dot(
            h, wcat_ref[...], preferred_element_type=jnp.float32
        ).astype(hw_ref.dtype)


def _heads_decode_kernel(*refs, gae: bool, dzp: int):
    # K-tiled: acc += adj_blk @ hw_blk ; on last K: reparam + decode + sigmoid.
    if gae:
        adj_ref, hw_ref, wdec_ref, out_ref, acc_ref = refs
        noise_ref = None
    else:
        adj_ref, hw_ref, wdec_ref, noise_ref, out_ref, acc_ref = refs

    k = pl.program_id(1)

    @pl.when(k == 0)
    def _():
        acc_ref[...] = jnp.zeros_like(acc_ref)

    acc_ref[...] += jnp.dot(
        adj_ref[...], hw_ref[...], preferred_element_type=jnp.float32)

    @pl.when(k == pl.num_programs(1) - 1)
    def _():
        ms = acc_ref[...]                       # [:, :dzp]=mean, [:, dzp:]=logstd
        mean = ms[:, :dzp]
        if gae:
            z = mean
        else:
            z = noise_ref[...] * jnp.exp(ms[:, dzp:]) + mean
        logits = jnp.dot(z.astype(jnp.bfloat16), wdec_ref[...],
                         preferred_element_type=jnp.float32)
        out_ref[...] = _sigmoid(logits).astype(out_ref.dtype)


# ----------------------------------------------------------------- wrapper --

def prepare_vgae_features(adj, w_base, w_mean, w_logstd, w_dec, *, gae=False,
                          tile_n=None, tile_k=None):
    """One-time preparation: pad/cast the O(N^2) adjacency and the weights.

    Call once and reuse across forward calls — the per-call wrapper only pads
    the O(N*D) activations.  Casting to bf16 BEFORE padding halves the
    one-time pad traffic.
    """
    n = adj.shape[0]
    dim_in, dim_h = w_base.shape
    dim_z = w_mean.shape[1]
    n_pad, tn, tk = _choose_tiles(n, tile_n, tile_k)
    dim_in_p = _round_up(dim_in, 128)
    dim_h_p = _round_up(dim_h, 128)
    dim_z_p = _round_up(dim_z, 128)

    bf16 = jnp.bfloat16
    adj_p = _pad2(adj.astype(bf16), n_pad, n_pad)
    wb_p = _pad2(w_base.astype(bf16), dim_in_p, dim_h_p)
    wd_p = _pad2(w_dec.astype(bf16), dim_z_p, dim_in_p)
    wm_p = _pad2(w_mean.astype(bf16), dim_h_p, dim_z_p)
    if gae:
        heads, wcat = 1, wm_p                               # mean head only
    else:
        heads = 2
        ws_p = _pad2(w_logstd.astype(bf16), dim_h_p, dim_z_p)
        wcat = jnp.concatenate([wm_p, ws_p], axis=1)        # fused heads

    return dict(adj=adj_p, w_base=wb_p, w_heads=wcat, w_dec=wd_p, gae=gae,
                heads=heads, n=n, n_pad=n_pad, tile_n=tn, tile_k=tk,
                dim_in=dim_in, dim_in_p=dim_in_p, dim_h_p=dim_h_p,
                dim_z=dim_z, dim_z_p=dim_z_p)


def vgae_features_forward(prep, x, noise=None, *, out_dtype=jnp.float32):
    """Fused VGAE_features forward on TPU (row+K tiled, bf16 MXU / f32 acc)."""
    gae = prep["gae"]
    if not gae and noise is None:
        raise ValueError("noise is required when gae=False")

    bf16 = jnp.bfloat16
    n, n_pad = prep["n"], prep["n_pad"]
    tn, tk = prep["tile_n"], prep["tile_k"]
    dip, dhp, dzp = prep["dim_in_p"], prep["dim_h_p"], prep["dim_z_p"]
    heads = prep["heads"]
    adj_p, wb_p = prep["adj"], prep["w_base"]
    wcat, wd_p = prep["w_heads"], prep["w_dec"]

    x_p = _pad2(x.astype(bf16), n_pad, dip)

    rows = n_pad // tn
    ksteps = n_pad // tk

    # ---- Stage 1: xw = X @ W_base (row-tiled; contraction dim is small) ----
    need1 = 2 * 2 * (tn * dip + dip * dhp + tn * dhp)
    xw = pl.pallas_call(
        _proj_kernel,
        out_shape=jax.ShapeDtypeStruct((n_pad, dhp), bf16),
        grid=(rows,),
        in_specs=[
            pl.BlockSpec((tn, dip), lambda i: (i, 0)),
            pl.BlockSpec((dip, dhp), lambda i: (0, 0)),
        ],
        out_specs=pl.BlockSpec((tn, dhp), lambda i: (i, 0)),
        compiler_params=_compiler_params(("parallel",), need1),
    )(x_p, wb_p)

    # ---- Stage 2: hw = ELU(adj @ xw) @ [W_mean | W_logstd] (K-tiled) -------
    need2 = (2 * 2 * (tn * tk + tk * dhp + dhp * heads * dzp + tn * heads * dzp)
             + 4 * tn * dhp)
    hw = pl.pallas_call(
        _base_gcn_kernel,
        out_shape=jax.ShapeDtypeStruct((n_pad, heads * dzp), bf16),
        grid=(rows, ksteps),
        in_specs=[
            pl.BlockSpec((tn, tk), lambda i, k: (i, k)),
            pl.BlockSpec((tk, dhp), lambda i, k: (k, 0)),
            pl.BlockSpec((dhp, heads * dzp), lambda i, k: (0, 0)),
        ],
        out_specs=pl.BlockSpec((tn, heads * dzp), lambda i, k: (i, 0)),
        scratch_shapes=[pltpu.VMEM((tn, dhp), jnp.float32)],
        compiler_params=_compiler_params(("parallel", "arbitrary"), need2),
    )(adj_p, xw, wcat)

    # ---- Stage 3: adj hop of heads + reparam + decode + sigmoid (K-tiled) --
    kernel3 = functools.partial(_heads_decode_kernel, gae=gae, dzp=dzp)
    in_specs = [
        pl.BlockSpec((tn, tk), lambda i, k: (i, k)),
        pl.BlockSpec((tk, heads * dzp), lambda i, k: (k, 0)),
        pl.BlockSpec((dzp, dip), lambda i, k: (0, 0)),
    ]
    operands = [adj_p, hw, wd_p]
    out_itemsize = jnp.dtype(out_dtype).itemsize
    need3 = (2 * 2 * (tn * tk + tk * heads * dzp + dzp * dip)
             + 2 * out_itemsize * tn * dip
             + 4 * tn * heads * dzp)
    if not gae:
        noise_p = _pad2(noise.astype(jnp.float32), n_pad, dzp)
        in_specs.append(pl.BlockSpec((tn, dzp), lambda i, k: (i, 0)))
        operands.append(noise_p)
        need3 += 2 * 4 * tn * dzp

    out_p = pl.pallas_call(
        kernel3,
        out_shape=jax.ShapeDtypeStruct((n_pad, dip), out_dtype),
        grid=(rows, ksteps),
        in_specs=in_specs,
        out_specs=pl.BlockSpec((tn, dip), lambda i, k: (i, 0)),
        scratch_shapes=[pltpu.VMEM((tn, heads * dzp), jnp.float32)],
        compiler_params=_compiler_params(("parallel", "arbitrary"), need3),
    )(*operands)

    return out_p[:n, :prep["dim_in"]]


# -------------------------------------------------------------- references --

def _reference_forward(adj, x, w_base, w_mean, w_logstd, w_dec, noise, gae):
    """Pure f32 reference (mirrors the PyTorch module)."""
    h = _elu(adj @ (x @ w_base))
    mean = adj @ (h @ w_mean)
    if gae:
        z = mean
    else:
        logstd = adj @ (h @ w_logstd)
        z = noise * jnp.exp(logstd) + mean
    return _sigmoid(z @ w_dec)


def _mixed_reference(adj, x, w_base, w_mean, w_logstd, w_dec, noise, gae):
    """Reference with the same bf16-input / f32-accumulate casts as the kernel."""
    bf, f32 = jnp.bfloat16, jnp.float32
    adj_b = adj.astype(bf)
    xw = jnp.dot(x.astype(bf), w_base.astype(bf),
                 preferred_element_type=f32).astype(bf)
    h = _elu(jnp.dot(adj_b, xw, preferred_element_type=f32)).astype(bf)
    mean = jnp.dot(adj_b,
                   jnp.dot(h, w_mean.astype(bf),
                           preferred_element_type=f32).astype(bf),
                   preferred_element_type=f32)
    if gae:
        z = mean
    else:
        logstd = jnp.dot(adj_b,
                         jnp.dot(h, w_logstd.astype(bf),
                                 preferred_element_type=f32).astype(bf),
                         preferred_element_type=f32)
        z = noise * jnp.exp(logstd) + mean
    logits = jnp.dot(z.astype(bf), w_dec.astype(bf), preferred_element_type=f32)
    return _sigmoid(logits)


def _glorot(key, din, dout):
    r = jnp.sqrt(6.0 / (din + dout))
    return jax.random.uniform(key, (din, dout), jnp.float32, -r, r)


# -------------------------------------------------------------------- main --

if __name__ == "__main__":
    N, DIM_IN, DIM_H, DIM_Z = 16, 32, 32, 16

    key = jax.random.PRNGKey(0)
    k_adj, k_x, k_wb, k_wm, k_ws, k_wd, k_n = jax.random.split(key, 7)

    # Symmetric, row-normalised dense adjacency (stand-in for the sparse adj).
    a_raw = (jax.random.uniform(k_adj, (N, N)) < 0.3).astype(jnp.float32)
    a_sym = jnp.clip(a_raw + a_raw.T + jnp.eye(N, dtype=jnp.float32), 0.0, 1.0)
    adj = a_sym / jnp.sum(a_sym, axis=1, keepdims=True)

    x = jax.random.normal(k_x, (N, DIM_IN), jnp.float32)
    w_base = _glorot(k_wb, DIM_IN, DIM_H)
    w_mean = _glorot(k_wm, DIM_H, DIM_Z)
    w_logstd = _glorot(k_ws, DIM_H, DIM_Z)
    w_dec = jax.random.uniform(k_wd, (DIM_Z, DIM_IN), jnp.float32)  # torch.rand

    # TODO(synk): torch.randn_like noise is generated host-side (deterministic
    # key) and passed as an operand; the kernel itself is stateless.
    noise = jax.random.normal(k_n, (N, DIM_Z), jnp.float32)

    # Variational path (gae=False): encode + reparameterise + decode.
    prep = prepare_vgae_features(adj, w_base, w_mean, w_logstd, w_dec, gae=False)
    out = jax.block_until_ready(vgae_features_forward(prep, x, noise))
    assert out.shape == (N, DIM_IN)

    ref_mixed = _mixed_reference(adj, x, w_base, w_mean, w_logstd, w_dec,
                                 noise, gae=False)
    ref_f32 = _reference_forward(adj, x, w_base, w_mean, w_logstd, w_dec,
                                 noise, gae=False)
    assert float(jnp.max(jnp.abs(out - ref_mixed))) < 5e-3   # bf16-parity check
    assert float(jnp.max(jnp.abs(out - ref_f32))) < 2e-1     # loose f32 sanity

    # GAE path (gae=True): logstd head and noise operand are dropped entirely.
    prep_gae = prepare_vgae_features(adj, w_base, w_mean, w_logstd, w_dec,
                                     gae=True)
    out_gae = jax.block_until_ready(vgae_features_forward(prep_gae, x))
    ref_gae = _mixed_reference(adj, x, w_base, w_mean, w_logstd, w_dec,
                               None, gae=True)
    assert out_gae.shape == (N, DIM_IN)
    assert float(jnp.max(jnp.abs(out_gae - ref_gae))) < 5e-3

    print("KERNEL_OK")
</pallas_src>

<mosaic_0001>
module attributes {stable_mosaic.version = 11 : i64} {
  func.func @_proj_kernel(%arg0: i32, %arg1: memref<8x128xbf16, #tpu.memory_space<vmem>>, %arg2: memref<128x128xbf16, #tpu.memory_space<vmem>>, %arg3: memref<8x128xbf16, #tpu.memory_space<vmem>>) attributes {dimension_semantics = [#tpu.dimension_semantics<parallel>], iteration_bounds = array<i64: 2>, scalar_prefetch = 0 : i64, scratch_operands = 0 : i64, tpu.core_type = #tpu.core_type<tc>, window_params = [{transform_indices = @transform_0, window_bounds = array<i64: 8, 128>}, {pipeline_mode = #tpu.pipeline_mode<synchronous>, transform_indices = @transform_1, window_bounds = array<i64: 128, 128>}, {transform_indices = @transform_2, window_bounds = array<i64: 8, 128>}]} {
    %c0 = arith.constant 0 : index
    %c0_0 = arith.constant 0 : index
    %0 = vector.load %arg1[%c0, %c0_0] : memref<8x128xbf16, #tpu.memory_space<vmem>>, vector<8x128xbf16>
    %c0_1 = arith.constant 0 : index
    %c0_2 = arith.constant 0 : index
    %1 = vector.load %arg2[%c0_1, %c0_2] : memref<128x128xbf16, #tpu.memory_space<vmem>>, vector<128x128xbf16>
    %cst = arith.constant dense<0.000000e+00> : vector<8x128xf32>
    %2 = tpu.matmul %0, %1, %cst {dimension_numbers = #tpu.dot_dimension_numbers<[1], [0], [0], [1], [0, 0, 1, 1], [], []>} : vector<8x128xbf16>, vector<128x128xbf16>, vector<8x128xf32> -> vector<8x128xf32>
    %3 = arith.truncf %2 : vector<8x128xf32> to vector<8x128xbf16>
    %c0_3 = arith.constant 0 : index
    %c0_4 = arith.constant 0 : index
    %4 = vector.load %arg3[%c0_3, %c0_4] : memref<8x128xbf16, #tpu.memory_space<vmem>>, vector<8x128xbf16>
    tpu.vector_store %arg3[%c0_3, %c0_4], %3 {strides = array<i32>} : memref<8x128xbf16, #tpu.memory_space<vmem>>, vector<8x128xbf16>,
    return
  }
  func.func @transform_0(%arg0: i32) -> (i32, i32) {
    %c0_i32 = arith.constant 0 : i32
    %c0_i32_0 = arith.constant 0 : i32
    return %arg0, %c0_i32 : i32, i32
  }
  func.func @transform_1(%arg0: i32) -> (i32, i32) {
    %c0_i32 = arith.constant 0 : i32
    %c0_i32_0 = arith.constant 0 : i32
    %c0_i32_1 = arith.constant 0 : i32
    return %c0_i32, %c0_i32_0 : i32, i32
  }
  func.func @transform_2(%arg0: i32) -> (i32, i32) {
    %c0_i32 = arith.constant 0 : i32
    %c0_i32_0 = arith.constant 0 : i32
    return %arg0, %c0_i32 : i32, i32
  }
}

</mosaic_0001>

<llo_original>
// kernel: tpu_custom_call.1
$region0: #{tpu_custom_call.1}
  #allocation0 [shape = 'u32[]', space=smem, size = 0x4, offset = 0x4, fixed_abs, tag = 'smem constant byte address 0x4 - core index']
  #allocation1 [shape = 'u32[144,128]{1,0:T(1,128)}', space=vmem, size = 0x12000, scoped, tag = 'internal scratch']
  %s0 = inlined_call_operand.hbm [shape: bf16[16,128], index: 0, kind: input, shape index: {}]
  %s1 = inlined_call_operand.hbm [shape: bf16[128,128], index: 1, kind: input, shape index: {}]
  %s2 = inlined_call_operand.hbm [shape: bf16[16,128], index: 2, kind: output, shape index: {}]
  %s3 = sld [smem:[#allocation0]]
  $region49: #{tpu_custom_call.1} parent=0
    _
  %s5 = ssub.s32 1, %s3
  %s6 = scalar_select 0, %s5, %s3
  $region1: #{tpu_custom_call.1} parent=0
    #allocation2 [shape = 'u8[4096]{0}', space=vmem, size = 0x1000, scoped, tag = 'input window, operand 0']
    #allocation3 [shape = 's32[2]{0}', space=sflag, size = 0x8, scoped, tag = 'scoped memory for tpu_custom_call.1']
    #allocation4 [shape = 's32[2]{0}', space=sflag, size = 0x8, scoped, tag = 'scoped memory for tpu_custom_call.1']
    #allocation5 [shape = 'u8[32768]{0}', space=vmem, size = 0x8000, scoped, tag = 'input window, operand 1, single buffered']
    #allocation6 [shape = 's32[1]{0}', space=sflag, size = 0x4, scoped, tag = 'scoped memory for tpu_custom_call.1']
    #allocation7 [shape = 'u8[4096]{0}', space=vmem, size = 0x1000, scoped, tag = 'output window, operand 0']
    %7 = vsyncpa [#allocation3], 0
    %s8 = scalar_lea.sflag [#allocation3], 1
    %9 = vsyncpa %s8, 0
    %10 = vsyncpa [#allocation6], 0
    %11 = vsyncpa [#allocation4], 0
    %s12 = scalar_lea.sflag [#allocation4], 1
    %13 = vsyncpa %s12, 0
    loop: start=0, step=1, limit=4
    $region2: #{tpu_custom_call.1} parent=1 // loop_pre_header
      _
    $region3: #{tpu_custom_call.1} parent=1 // loop_header
      %s15 = sphi 0, %s19
      %p16 = scmp.ge.s32.totalorder %s15, 4
      %s25 = sphi 0, %s27
      %s28 = sphi 0, %s25
      %s29 = sphi 0, %s28
      %s45 = sphi 0, %s29
      %s49 = sphi 0, %s49
      %s51 = sphi 0, %s49
      %s52 = sphi 0, %s51
      %s66 = sphi 0, %s52
      %s72 = sphi 0, %s74
      %s75 = sphi 0, %s72
      %s76 = sphi 0, %s75
      %s92 = sphi 0, %s76
    $region4: #{tpu_custom_call.1} parent=1 // loop_header_branch
      %18 = sbr.rel (%p16) target = $region8
    $region5: #{tpu_custom_call.1} parent=1 // loop_body
      %s20 = ssub.s32 %s15, 1
      %s21 = ssub.s32 %s15, 2
      %s22 = sadd.s32 %s15, 1
      %s23 = ssub.s32 %s15, %s22
      %p24 = scmp.eq.s32.totalorder %s23, 0
      %s26 = sadd.s32 %s25, 1
      %s27 = scalar_select %p24, %s25, %s26
      %p30 = pneg %p24
      %p31 = scmp.eq.s32.totalorder %s15, 1
      %p32 = por %p30, %p31
      %p33 = scmp.ne.s32.totalorder %s25, %s28
      %p34 = scmp.eq.s32.totalorder %s15, 0
      %p35 = por %p33, %p34
      %p36 = scmp.ne.s32.totalorder %s25, %s28
      %p37 = scmp.eq.s32.totalorder %s20, 1
      %p38 = por %p36, %p37
      %p39 = scmp.ne.s32.totalorder %s28, %s29
      %p40 = scmp.eq.s32.totalorder %s20, 0
      %p41 = por %p39, %p40
      %p42 = scmp.ne.s32.totalorder %s28, %s29
      %p43 = scmp.eq.s32.totalorder %s21, 1
      %p44 = por %p42, %p43
      %p46 = scmp.ne.s32.totalorder %s29, %s45
      %p47 = scmp.eq.s32.totalorder %s21, 0
      %p48 = por %p46, %p47
      %s50 = sadd.s32 %s49, 1
      %p53 = scmp.eq.s32.totalorder %s15, 1
      %p54 = scmp.ne.s32.totalorder %s49, %s51
      %p55 = scmp.eq.s32.totalorder %s15, 0
      %p56 = por %p54, %p55
      %p57 = scmp.ne.s32.totalorder %s49, %s51
      %p58 = scmp.eq.s32.totalorder %s20, 1
      %p59 = por %p57, %p58
      %p60 = scmp.ne.s32.totalorder %s51, %s52
      %p61 = scmp.eq.s32.totalorder %s20, 0
      %p62 = por %p60, %p61
      %p63 = scmp.ne.s32.totalorder %s51, %s52
      %p64 = scmp.eq.s32.totalorder %s21, 1
      %p65 = por %p63, %p64
      %p67 = scmp.ne.s32.totalorder %s52, %s66
      %p68 = scmp.eq.s32.totalorder %s21, 0
      %p69 = por %p67, %p68
      %s70 = ssub.s32 %s15, %s22
      %p71 = scmp.eq.s32.totalorder %s70, 0
      %s73 = sadd.s32 %s72, 1
      %s74 = scalar_select %p71, %s72, %s73
      %p77 = pneg %p71
      %p78 = scmp.eq.s32.totalorder %s15, 1
      %p79 = por %p77, %p78
      %p80 = scmp.ne.s32.totalorder %s72, %s75
      %p81 = scmp.eq.s32.totalorder %s15, 0
      %p82 = por %p80, %p81
      %p83 = scmp.ne.s32.totalorder %s72, %s75
      %p84 = scmp.eq.s32.totalorder %s20, 1
      %p85 = por %p83, %p84
      %p86 = scmp.ne.s32.totalorder %s75, %s76
      %p87 = scmp.eq.s32.totalorder %s20, 0
      %p88 = por %p86, %p87
      %p89 = scmp.ne.s32.totalorder %s75, %s76
      %p90 = scmp.eq.s32.totalorder %s21, 1
      %p91 = por %p89, %p90
      %p93 = scmp.ne.s32.totalorder %s76, %s92
      %p94 = scmp.eq.s32.totalorder %s21, 0
      %p95 = por %p93, %p94
      %p96 = scmp.le.s32.totalorder 1, %s15
      %p97 = scmp.lt.s32.totalorder %s15, 3
      %p98 = pnand %p96, %p97
      %p99 = pneg %p98
      // Predicated region
      $region9: #{tpu_custom_call.1} parent=5 // pred_check
        _
      $region10: #{tpu_custom_call.1} parent=5 // pred_check_branch
        %101 = sbr.rel (%p98) target = $region12
      $region11: #{tpu_custom_call.1} parent=5 // pred_region
        %s102 = ssub.s32 %s15, 1
        // Predicated region
        $region13: #{tpu_custom_call.1} parent=11 // pred_check
          %p103 = pneg %p62
        $region14: #{tpu_custom_call.1} parent=11 // pred_check_branch
          %105 = sbr.rel (%p103) target = $region16
        $region15: #{tpu_custom_call.1} parent=11 // pred_region
          %s107 = ssub.s32 1024, 1024
          %108 = vsyncadd [#allocation6], %s107
          %s109 = sshll.u32 [#allocation5], 4
          %s110 = int_to_ptr.vmem [resolvable:$true] %s109
          %115 = dma.hbm_to_vmem [thread:$0]  %s1, 1024, %s110, [#allocation6], 64, 64, 4
        $region16: #{tpu_custom_call.1} parent=11 // pred_fallthru
          _
      $region12: #{tpu_custom_call.1} parent=5 // pred_fallthru
        _
      %p116 = scmp.lt.s32.totalorder %s15, 2
      // Predicated region
      $region17: #{tpu_custom_call.1} parent=5 // pred_check
        %p117 = pneg %p116
      $region18: #{tpu_custom_call.1} parent=5 // pred_check_branch
        %119 = sbr.rel (%p117) target = $region20
      $region19: #{tpu_custom_call.1} parent=5 // pred_region
        // Predicated region
        $region21: #{tpu_custom_call.1} parent=19 // pred_check
          %p120 = pneg %p35
        $region22: #{tpu_custom_call.1} parent=19 // pred_check_branch
          %122 = sbr.rel (%p120) target = $region24
        $region23: #{tpu_custom_call.1} parent=19 // pred_region
          %s123 = sand.u32 %s25, 1
          %s124 = scalar_lea.sflag [#allocation3], %s123
          %s125 = sand.u32 %s25, 1
          %s126 = smul.addr %s125, 4
          %s127 = scalar_lea.vmem [#allocation2], %s126
          %s129 = ssub.s32 64, 64
          %130 = vsyncadd %s124, %s129
          %s131 = smul.addr %s15, 64
          %s132 = scalar_lea.hbm %s0, %s131
          %s134 = sshll.u32 %s127, 4
          %s135 = int_to_ptr.vmem [resolvable:$true] %s134
          %137 = dma.hbm_to_vmem [thread:$0]  %s132, 64, %s135, %s124
        $region24: #{tpu_custom_call.1} parent=19 // pred_fallthru
          _
      $region20: #{tpu_custom_call.1} parent=5 // pred_fallthru
        _
      %p138 = scmp.le.s32.totalorder 1, %s15
      %p139 = scmp.lt.s32.totalorder %s15, 3
      %p140 = pnand %p138, %p139
      %p141 = pneg %p140
      // Predicated region
      $region25: #{tpu_custom_call.1} parent=5 // pred_check
        _
      $region26: #{tpu_custom_call.1} parent=5 // pred_check_branch
        %143 = sbr.rel (%p140) target = $region28
      $region27: #{tpu_custom_call.1} parent=5 // pred_region
        %s144 = ssub.s32 %s15, 1
        %s145 = sand.u32 %s28, 1
        %s146 = scalar_lea.sflag [#allocation3], %s145
        %s147 = sand.u32 %s28, 1
        %s148 = smul.addr %s147, 4
        %s149 = scalar_lea.vmem [#allocation2], %s148
        // Predicated region
        $region29: #{tpu_custom_call.1} parent=27 // pred_check
          %p150 = pneg %p41
        $region30: #{tpu_custom_call.1} parent=27 // pred_check_branch
          %152 = sbr.rel (%p150) target = $region32
        $region31: #{tpu_custom_call.1} parent=27 // pred_region
          %153 = dma.done %s146, 64
        $region32: #{tpu_custom_call.1} parent=27 // pred_fallthru
          _
        // Predicated region
        $region33: #{tpu_custom_call.1} parent=27 // pred_check
          %p154 = pneg %p62
        $region34: #{tpu_custom_call.1} parent=27 // pred_check_branch
          %156 = sbr.rel (%p154) target = $region36
        $region35: #{tpu_custom_call.1} parent=27 // pred_region
          %157 = dma.done [#allocation6], 1024
        $region36: #{tpu_custom_call.1} parent=27 // pred_fallthru
          _
        %s158 = sand.u32 %s28, 1
        %s159 = scalar_lea.sflag [#allocation3], %s158
        %s160 = sand.u32 %s28, 1
        %s161 = smul.addr %s160, 4
        %s162 = scalar_lea.vmem [#allocation2], %s161
        %p163 = pneg %p41
        %p164 = pneg %p38
        %p165 = pneg %p62
        %p166 = pneg %p59
        %p167 = pneg %p88
        %p168 = pneg %p85
        %s169 = sand.u32 %s75, 1
        %s170 = scalar_lea.sflag [#allocation4], %s169
        %s171 = sand.u32 %s75, 1
        %s172 = smul.addr %s171, 4
        %s173 = scalar_lea.vmem [#allocation7], %s172
        %v175 = vld [vmem:[%s149] sm:$0xf]
        %v176 = vld [vmem:[#allocation5] sm:$0xf]
        %v177 = vld [vmem:[#allocation5 + $0x4] sm:$0xf]
        %v178 = vld [vmem:[#allocation5 + $0x8] sm:$0xf]
        %v179 = vld [vmem:[#allocation5 + $0xc] sm:$0xf]
        %v180 = vld [vmem:[#allocation5 + $0x10] sm:$0xf]
        %v181 = vld [vmem:[#allocation5 + $0x14] sm:$0xf]
        %v182 = vld [vmem:[#allocation5 + $0x18] sm:$0xf]
        %v183 = vld [vmem:[#allocation5 + $0x1c] sm:$0xf]
        %v184 = vld [vmem:[#allocation5 + $0x20] sm:$0xf]
        %v185 = vld [vmem:[#allocation5 + $0x24] sm:$0xf]
        %v186 = vld [vmem:[#allocation5 + $0x28] sm:$0xf]
        %v187 = vld [vmem:[#allocation5 + $0x2c] sm:$0xf]
        %v188 = vld [vmem:[#allocation5 + $0x30] sm:$0xf]
        %v189 = vld [vmem:[#allocation5 + $0x34] sm:$0xf]
        %v190 = vld [vmem:[#allocation5 + $0x38] sm:$0xf]
        %v191 = vld [vmem:[#allocation5 + $0x3c] sm:$0xf]
        %v208 = vunpack.c.l.b16 %v176
        %v209 = vunpack.c.l.b16 %v177
        %v210 = vunpack.c.l.b16 %v178
        %v211 = vunpack.c.l.b16 %v179
        %v212 = vunpack.c.l.b16 %v180
        %v213 = vunpack.c.l.b16 %v181
        %v214 = vunpack.c.l.b16 %v182
        %v215 = vunpack.c.l.b16 %v183
        %v216 = vunpack.c.l.b16 %v184
        %v217 = vunpack.c.l.b16 %v185
        %v218 = vunpack.c.l.b16 %v186
        %v219 = vunpack.c.l.b16 %v187
        %v220 = vunpack.c.l.b16 %v188
        %v221 = vunpack.c.l.b16 %v189
        %v222 = vunpack.c.l.b16 %v190
        %v223 = vunpack.c.l.b16 %v191
        %v224 = vpack.c.b16 %v209, %v208
        %v225 = vpack.c.b16 %v211, %v210
        %v226 = vpack.c.b16 %v213, %v212
        %v227 = vpack.c.b16 %v215, %v214
        %v228 = vpack.c.b16 %v217, %v216
        %v229 = vpack.c.b16 %v219, %v218
        %v230 = vpack.c.b16 %v221, %v220
        %v231 = vpack.c.b16 %v223, %v222
        %240 = vmatprep.subr.bf16.mxu0 0
        %241 = vmatpush1.bf16.msra.mxu0 %v224
        %242 = vmatprep.subr.bf16.mxu0 0
        %243 = vmatpush1.bf16.msra.mxu0 %v225
        %244 = vmatprep.subr.bf16.mxu0 0
        %245 = vmatpush1.bf16.msra.mxu0 %v226
        %246 = vmatprep.subr.bf16.mxu0 0
        %247 = vmatpush1.bf16.msra.mxu0 %v227
        %248 = vmatprep.subr.bf16.mxu0 0
        %249 = vmatpush1.bf16.msra.mxu0 %v228
        %250 = vmatprep.subr.bf16.mxu0 0
        %251 = vmatpush1.bf16.msra.mxu0 %v229
        %252 = vmatprep.subr.bf16.mxu0 0
        %253 = vmatpush1.bf16.msra.mxu0 %v230
        %254 = vmatprep.subr.bf16.mxu0 0
        %255 = vmatpush1.bf16.msra.mxu0 %v231
        %256 = vmatprep.subr.bf16.mxu0 0
        %257 = vmatpush1.bf16.msra.mxu0 0
        %258 = vmatprep.subr.bf16.mxu0 0
        %259 = vmatpush1.bf16.msra.mxu0 0
        %260 = vmatprep.subr.bf16.mxu0 0
        %261 = vmatpush1.bf16.msra.mxu0 0
        %262 = vmatprep.subr.bf16.mxu0 0
        %263 = vmatpush1.bf16.msra.mxu0 0
        %264 = vmatprep.subr.bf16.mxu0 0
        %265 = vmatpush1.bf16.msra.mxu0 0
        %266 = vmatprep.subr.bf16.mxu0 0
        %267 = vmatpush1.bf16.msra.mxu0 0
        %268 = vmatprep.subr.bf16.mxu0 0
        %269 = vmatpush1.bf16.msra.mxu0 0
        %270 = vmatprep.subr.bf16.mxu0 0
        %271 = vmatpush1.bf16.msra.mxu0 0
        %272 = vmatprep.mubr.bf16.mxu0 0
        %273 = vmatmul.mubr.bf16.gmra.mrb[0].mxu0 %v175
        %v274 = vpop.f32.mrb[0].mxu0
        %v275 = vadd.f32 0.0, %v274
        %v276 = vpop.f32.mrb[0].mxu0
        %v277 = vpop.f32.mrb[0].mxu0
        %v278 = vpop.f32.mrb[0].mxu0
        %279 = vdwg.mxu0
        %v280 = vpack.c.bf16 %v275, %v275
        %281 = vst [vmem:[%s173] sm:$0xf] %v280
        %s282 = sand.u32 %s75, 1
        %s283 = scalar_lea.sflag [#allocation4], %s282
        %s284 = sand.u32 %s75, 1
        %s285 = smul.addr %s284, 4
        %s286 = scalar_lea.vmem [#allocation7], %s285
        // Predicated region
        $region37: #{tpu_custom_call.1} parent=27 // pred_check
          %p287 = pneg %p85
        $region38: #{tpu_custom_call.1} parent=27 // pred_check_branch
          %289 = sbr.rel (%p287) target = $region40
        $region39: #{tpu_custom_call.1} parent=27 // pred_region
          %s291 = ssub.s32 64, 64
          %292 = vsyncadd %s283, %s291
          %s293 = smul.addr %s20, 64
          %s294 = scalar_lea.hbm %s2, %s293
          %s296 = sshll.u32 %s286, 4
          %s297 = int_to_ptr.vmem [resolvable:$true] %s296
          %299 = dma.vmem_to_hbm [thread:$0]  %s297, 64, %s294, %s283
        $region40: #{tpu_custom_call.1} parent=27 // pred_fallthru
          _
      $region28: #{tpu_custom_call.1} parent=5 // pred_fallthru
        _
      %p300 = scmp.le.s32.totalorder 2, %s15
      // Predicated region
      $region41: #{tpu_custom_call.1} parent=5 // pred_check
        %p301 = pneg %p300
      $region42: #{tpu_custom_call.1} parent=5 // pred_check_branch
        %303 = sbr.rel (%p301) target = $region44
      $region43: #{tpu_custom_call.1} parent=5 // pred_region
        %s304 = ssub.s32 %s15, 2
        // Predicated region
        $region45: #{tpu_custom_call.1} parent=43 // pred_check
          %p305 = pneg %p91
        $region46: #{tpu_custom_call.1} parent=43 // pred_check_branch
          %307 = sbr.rel (%p305) target = $region48
        $region47: #{tpu_custom_call.1} parent=43 // pred_region
          %s308 = sand.u32 %s76, 1
          %s309 = scalar_lea.sflag [#allocation4], %s308
          %s310 = sand.u32 %s76, 1
          %s311 = smul.addr %s310, 4
          %s312 = scalar_lea.vmem [#allocation7], %s311
          %313 = dma.done %s309, 64
        $region48: #{tpu_custom_call.1} parent=43 // pred_fallthru
          _
      $region44: #{tpu_custom_call.1} parent=5 // pred_fallthru
        _
    $region6: #{tpu_custom_call.1} parent=1 // loop_footer
      %s19 = sadd.s32 1, %s15
    $region7: #{tpu_custom_call.1} parent=1 // loop_footer_branch
      %14 = sbr.rel target = $region3
    $region8: #{tpu_custom_call.1} parent=1 // loop_exit
      _
    %314 = vsyncpa [#allocation3], 1
    %s315 = scalar_lea.sflag [#allocation3], 1
    %316 = vsyncpa %s315, 1
    %317 = vsyncpa [#allocation6], 1
    %318 = vsyncpa [#allocation4], 1
    %s319 = scalar_lea.sflag [#allocation4], 1
    %320 = vsyncpa %s319, 1

</llo_original>
